<compile_context>
chip_gen: v5e
topology: v5e:2x2
jax: 0.10.0
libtpu: 0.0.40
codegen_flags: <defaults>
</compile_context>

<pallas_src>
import math

import jax
import jax.numpy as jnp
from jax.experimental import pallas as pl
from jax.experimental.pallas import tpu as pltpu


def _round_up(x: int, m: int) -> int:
    return ((x + m - 1) // m) * m


def _cdiv(a: int, b: int) -> int:
    return (a + b - 1) // b


def _make_fourier_kernel(dimension: int, n_freqs: int, margin: float, chunk: int):
    half = dimension // 2
    n_chunks = half // chunk

    def kernel(pos_ref, fgrid_ref, ex_ref, ey_ref, out_ref):
        # pos_ref:   (TILE, 2)          f32  positions
        # fgrid_ref: (2, 2*nf)          f32  [[c*k, 0], [0, c*k]]
        # ex_ref:    (2*nf, half)       f32  0/1: repeat each x-phase nf times
        # ey_ref:    (2*nf, half)       f32  0/1: tile the y-phases nf times
        # out_ref:   (TILE, dimension)  f32
        pos = pos_ref[...] + margin                                   # (TILE, 2)
        # Per-coordinate phases, lane-packed [ax | ay] -- degenerate K=2 matmul
        # stays on the (otherwise idle) MXU, keeping the VALU free.
        ph = jnp.dot(pos, fgrid_ref[...],
                     preferred_element_type=jnp.float32)              # (TILE, 2*nf)
        cos_ph = jnp.cos(ph)                                          # EUP: 2*nf/row
        sin_ph = jnp.sin(ph)
        # Expand to full width in lane-aligned column chunks (bounds VMEM temps
        # and vst pressure).  Static short loop == fully unrolled.
        for c in range(n_chunks):
            lo = c * chunk
            ex_c = ex_ref[:, lo:lo + chunk]                           # (2*nf, chunk)
            ey_c = ey_ref[:, lo:lo + chunk]
            ca = jnp.dot(cos_ph, ex_c, preferred_element_type=jnp.float32)
            sa = jnp.dot(sin_ph, ex_c, preferred_element_type=jnp.float32)
            cb = jnp.dot(cos_ph, ey_c, preferred_element_type=jnp.float32)
            sb = jnp.dot(sin_ph, ey_c, preferred_element_type=jnp.float32)
            # Angle addition: 3 VALU ops per output element, full-width,
            # stored lane-dense at 128-aligned offsets.
            out_ref[:, lo:lo + chunk] = ca * cb - sa * sb             # cos(a+b)
            out_ref[:, half + lo:half + lo + chunk] = sa * cb + ca * sb  # sin(a+b)

    return kernel


def _reference(positions: jax.Array, dimension: int = 2048,
               margin: float = 0.2) -> jax.Array:
    """Pure-JAX port of the PyTorch forward (also the small-input fast path)."""
    *O, D = positions.shape
    assert D == 2
    n_freqs = int(round((dimension // 2) ** 0.5))
    pos = positions.astype(jnp.float32) + margin
    freqs = jnp.arange(n_freqs, dtype=jnp.float32)
    width = 1.0 + 2.0 * margin
    p_x = 2.0 * math.pi * freqs[:, None] / width          # (nf, 1)
    p_y = 2.0 * math.pi * freqs / width                   # (nf,)
    pos = pos[..., None, None, :]
    loc = (pos[..., 0] * p_x + pos[..., 1] * p_y).reshape(*O, -1)
    return jnp.concatenate([jnp.cos(loc), jnp.sin(loc)], axis=-1)


def fourier_embedding(positions: jax.Array, dimension: int = 2048,
                      margin: float = 0.2, *, max_tile: int = 1024,
                      use_kernel=None) -> jax.Array:
    """positions: [B, C, 2] -> Fourier embedding [B, C, dimension]."""
    *O, D = positions.shape
    assert D == 2
    half = dimension // 2
    n_freqs = int(round(half ** 0.5))
    assert n_freqs * n_freqs * 2 == dimension, "dimension must be 2 * k^2"

    n_rows = 1
    for o in O:
        n_rows *= int(o)

    if use_kernel is None:
        # Tiny inputs: pallas_call fixed cost dominates; fused XLA is as fast.
        use_kernel = n_rows >= 256
    if not use_kernel:
        return _reference(positions, dimension, margin)

    width = 1.0 + 2.0 * margin
    coef = 2.0 * math.pi / width
    pos_flat = positions.astype(jnp.float32).reshape(n_rows, 2)

    # --- constant tables (resident in VMEM across the whole grid) -----------
    f = coef * jnp.arange(n_freqs, dtype=jnp.float32)
    z = jnp.zeros_like(f)
    fgrid = jnp.stack([jnp.concatenate([f, z]),
                       jnp.concatenate([z, f])], axis=0)              # (2, 2*nf)
    idx = jnp.arange(2 * n_freqs, dtype=jnp.int32)[:, None]           # (2*nf, 1)
    k = jnp.arange(half, dtype=jnp.int32)[None, :]                    # (1, half)
    ex = ((idx < n_freqs) & (idx == k // n_freqs)).astype(jnp.float32)        # (2*nf, half)
    ey = ((idx >= n_freqs) & (idx - n_freqs == k % n_freqs)).astype(jnp.float32)

    # Column chunk for the in-kernel expansion loop (multiple of 128 lanes).
    chunk = 512 if (half % 512 == 0 and half > 512) else half

    # --- row tiling ----------------------------------------------------------
    if n_rows <= 256:
        # Single small block: exact row count (full-dim block, no pad, no
        # partial-block masking needed).
        tile_rows = n_rows
    else:
        tile_rows = min(max_tile, _round_up(n_rows, 8))
        if n_rows <= 2 * tile_rows:
            # Split into >= 2 balanced grid steps so both TensorCores of a
            # v7x megacore get work on this write-bound kernel.
            tile_rows = min(tile_rows, max(8, _round_up(_cdiv(n_rows, 2), 8)))
    grid = _cdiv(n_rows, tile_rows)

    # Pad only the tiny positions input (8 B/row); the output keeps its exact
    # row count -- out-of-bounds rows of the last (partial) block are masked by
    # Pallas, so no padded-output copy/slice is ever materialized.
    n_pad = grid * tile_rows
    if n_pad != n_rows:
        pos_flat = jnp.pad(pos_flat, ((0, n_pad - n_rows), (0, 0)))

    kernel = _make_fourier_kernel(dimension, n_freqs, margin, chunk)

    out = pl.pallas_call(
        kernel,
        out_shape=jax.ShapeDtypeStruct((n_rows, dimension), jnp.float32),
        grid=(grid,),
        in_specs=[
            pl.BlockSpec((tile_rows, 2), lambda i: (i, 0)),            # positions tile
            pl.BlockSpec((2, 2 * n_freqs), lambda i: (0, 0)),          # phase table
            pl.BlockSpec((2 * n_freqs, half), lambda i: (0, 0)),       # expand-x (0/1)
            pl.BlockSpec((2 * n_freqs, half), lambda i: (0, 0)),       # expand-y (0/1)
        ],
        out_specs=pl.BlockSpec((tile_rows, dimension), lambda i: (i, 0)),
        compiler_params=pltpu.CompilerParams(
            dimension_semantics=("parallel",),
            vmem_limit_bytes=48 * 1024 * 1024,
        ),
    )(pos_flat, fgrid, ex, ey)

    return out.reshape(*O, dimension)


if __name__ == "__main__":
    dimension = 2048   # n_freqs = 32
    margin = 0.2
    k1, k2, k3 = jax.random.split(jax.random.PRNGKey(0), 3)

    # 1) Small [B, C, 2] forced through the kernel (single exact block).
    p1 = jax.random.uniform(k1, (2, 4, 2), dtype=jnp.float32)
    e1 = jax.block_until_ready(
        fourier_embedding(p1, dimension, margin, use_kernel=True))
    r1 = _reference(p1, dimension, margin)
    assert e1.shape == (2, 4, dimension)
    assert jnp.allclose(e1, r1, atol=2e-4, rtol=2e-4)

    # 2) Row count not a multiple of 8 (15 rows) -> exact full-dim block.
    p2 = jax.random.uniform(k2, (3, 5, 2), dtype=jnp.float32)
    e2 = jax.block_until_ready(
        fourier_embedding(p2, dimension, margin, use_kernel=True))
    r2 = _reference(p2, dimension, margin)
    assert e2.shape == (3, 5, dimension)
    assert jnp.allclose(e2, r2, atol=2e-4, rtol=2e-4)

    # 3) Multi-step parallel grid with a partial last output block
    #    (1202 rows -> two balanced 608-row tiles, masked tail writes).
    p3 = jax.random.uniform(k3, (2, 601, 2), dtype=jnp.float32)
    e3 = jax.block_until_ready(
        fourier_embedding(p3, dimension, margin, use_kernel=True))
    r3 = _reference(p3, dimension, margin)
    assert e3.shape == (2, 601, dimension)
    assert jnp.allclose(e3, r3, atol=2e-4, rtol=2e-4)

    # 4) Auto path: tiny input takes the fused pure-JAX fast path.
    e4 = jax.block_until_ready(fourier_embedding(p1, dimension, margin))
    assert jnp.allclose(e4, r1, atol=2e-4, rtol=2e-4)

    print("KERNEL_OK")
</pallas_src>

<mosaic_0001>
module attributes {stable_mosaic.version = 11 : i64} {
  func.func @kernel(%arg0: i32, %arg1: memref<8x2xf32, #tpu.memory_space<vmem>>, %arg2: memref<2x64xf32, #tpu.memory_space<vmem>>, %arg3: memref<64x1024xf32, #tpu.memory_space<vmem>>, %arg4: memref<64x1024xf32, #tpu.memory_space<vmem>>, %arg5: memref<8x2048xf32, #tpu.memory_space<vmem>>) attributes {dimension_semantics = [#tpu.dimension_semantics<parallel>], iteration_bounds = array<i64: 1>, scalar_prefetch = 0 : i64, scratch_operands = 0 : i64, tpu.core_type = #tpu.core_type<tc>, window_params = [{transform_indices = @transform_0, window_bounds = array<i64: 8, 2>}, {pipeline_mode = #tpu.pipeline_mode<synchronous>, transform_indices = @transform_1, window_bounds = array<i64: 2, 64>}, {pipeline_mode = #tpu.pipeline_mode<synchronous>, transform_indices = @transform_2, window_bounds = array<i64: 64, 1024>}, {pipeline_mode = #tpu.pipeline_mode<synchronous>, transform_indices = @transform_3, window_bounds = array<i64: 64, 1024>}, {transform_indices = @transform_4, window_bounds = array<i64: 8, 2048>}]} {
    %c0 = arith.constant 0 : index
    %c0_0 = arith.constant 0 : index
    %0 = vector.load %arg1[%c0, %c0_0] : memref<8x2xf32, #tpu.memory_space<vmem>>, vector<8x2xf32>
    %cst = arith.constant 2.000000e-01 : f32
    %1 = vector.broadcast %cst : f32 to vector<8x2xf32>
    %2 = arith.addf %0, %1 : vector<8x2xf32>
    %c0_1 = arith.constant 0 : index
    %c0_2 = arith.constant 0 : index
    %3 = vector.load %arg2[%c0_1, %c0_2] : memref<2x64xf32, #tpu.memory_space<vmem>>, vector<2x64xf32>
    %cst_3 = arith.constant dense<0.000000e+00> : vector<8x64xf32>
    %4 = tpu.matmul %2, %3, %cst_3 {dimension_numbers = #tpu.dot_dimension_numbers<[1], [0], [0], [1], [0, 0, 1, 1], [], []>} : vector<8x2xf32>, vector<2x64xf32>, vector<8x64xf32> -> vector<8x64xf32>
    %5 = math.cos %4 : vector<8x64xf32>
    %6 = math.sin %4 : vector<8x64xf32>
    %c0_4 = arith.constant 0 : index
    %c0_5 = arith.constant 0 : index
    %7 = vector.load %arg3[%c0_4, %c0_5] : memref<64x1024xf32, #tpu.memory_space<vmem>>, vector<64x512xf32>
    %c0_6 = arith.constant 0 : index
    %c0_7 = arith.constant 0 : index
    %8 = vector.load %arg4[%c0_6, %c0_7] : memref<64x1024xf32, #tpu.memory_space<vmem>>, vector<64x512xf32>
    %cst_8 = arith.constant dense<0.000000e+00> : vector<8x512xf32>
    %9 = tpu.matmul %5, %7, %cst_8 {dimension_numbers = #tpu.dot_dimension_numbers<[1], [0], [0], [1], [0, 0, 1, 1], [], []>} : vector<8x64xf32>, vector<64x512xf32>, vector<8x512xf32> -> vector<8x512xf32>
    %cst_9 = arith.constant dense<0.000000e+00> : vector<8x512xf32>
    %10 = tpu.matmul %6, %7, %cst_9 {dimension_numbers = #tpu.dot_dimension_numbers<[1], [0], [0], [1], [0, 0, 1, 1], [], []>} : vector<8x64xf32>, vector<64x512xf32>, vector<8x512xf32> -> vector<8x512xf32>
    %cst_10 = arith.constant dense<0.000000e+00> : vector<8x512xf32>
    %11 = tpu.matmul %5, %8, %cst_10 {dimension_numbers = #tpu.dot_dimension_numbers<[1], [0], [0], [1], [0, 0, 1, 1], [], []>} : vector<8x64xf32>, vector<64x512xf32>, vector<8x512xf32> -> vector<8x512xf32>
    %cst_11 = arith.constant dense<0.000000e+00> : vector<8x512xf32>
    %12 = tpu.matmul %6, %8, %cst_11 {dimension_numbers = #tpu.dot_dimension_numbers<[1], [0], [0], [1], [0, 0, 1, 1], [], []>} : vector<8x64xf32>, vector<64x512xf32>, vector<8x512xf32> -> vector<8x512xf32>
    %13 = arith.mulf %9, %11 : vector<8x512xf32>
    %14 = arith.mulf %10, %12 : vector<8x512xf32>
    %15 = arith.subf %13, %14 : vector<8x512xf32>
    %c0_12 = arith.constant 0 : index
    %c0_13 = arith.constant 0 : index
    %16 = vector.load %arg5[%c0_12, %c0_13] : memref<8x2048xf32, #tpu.memory_space<vmem>>, vector<8x512xf32>
    tpu.vector_store %arg5[%c0_12, %c0_13], %15 {strides = array<i32>} : memref<8x2048xf32, #tpu.memory_space<vmem>>, vector<8x512xf32>,
    %17 = arith.mulf %10, %11 : vector<8x512xf32>
    %18 = arith.mulf %9, %12 : vector<8x512xf32>
    %19 = arith.addf %17, %18 : vector<8x512xf32>
    %c0_14 = arith.constant 0 : index
    %c1024 = arith.constant 1024 : index
    %20 = vector.load %arg5[%c0_14, %c1024] : memref<8x2048xf32, #tpu.memory_space<vmem>>, vector<8x512xf32>
    tpu.vector_store %arg5[%c0_14, %c1024], %19 {strides = array<i32>} : memref<8x2048xf32, #tpu.memory_space<vmem>>, vector<8x512xf32>,
    %c0_15 = arith.constant 0 : index
    %c512 = arith.constant 512 : index
    %21 = vector.load %arg3[%c0_15, %c512] : memref<64x1024xf32, #tpu.memory_space<vmem>>, vector<64x512xf32>
    %c0_16 = arith.constant 0 : index
    %c512_17 = arith.constant 512 : index
    %22 = vector.load %arg4[%c0_16, %c512_17] : memref<64x1024xf32, #tpu.memory_space<vmem>>, vector<64x512xf32>
    %cst_18 = arith.constant dense<0.000000e+00> : vector<8x512xf32>
    %23 = tpu.matmul %5, %21, %cst_18 {dimension_numbers = #tpu.dot_dimension_numbers<[1], [0], [0], [1], [0, 0, 1, 1], [], []>} : vector<8x64xf32>, vector<64x512xf32>, vector<8x512xf32> -> vector<8x512xf32>
    %cst_19 = arith.constant dense<0.000000e+00> : vector<8x512xf32>
    %24 = tpu.matmul %6, %21, %cst_19 {dimension_numbers = #tpu.dot_dimension_numbers<[1], [0], [0], [1], [0, 0, 1, 1], [], []>} : vector<8x64xf32>, vector<64x512xf32>, vector<8x512xf32> -> vector<8x512xf32>
    %cst_20 = arith.constant dense<0.000000e+00> : vector<8x512xf32>
    %25 = tpu.matmul %5, %22, %cst_20 {dimension_numbers = #tpu.dot_dimension_numbers<[1], [0], [0], [1], [0, 0, 1, 1], [], []>} : vector<8x64xf32>, vector<64x512xf32>, vector<8x512xf32> -> vector<8x512xf32>
    %cst_21 = arith.constant dense<0.000000e+00> : vector<8x512xf32>
    %26 = tpu.matmul %6, %22, %cst_21 {dimension_numbers = #tpu.dot_dimension_numbers<[1], [0], [0], [1], [0, 0, 1, 1], [], []>} : vector<8x64xf32>, vector<64x512xf32>, vector<8x512xf32> -> vector<8x512xf32>
    %27 = arith.mulf %23, %25 : vector<8x512xf32>
    %28 = arith.mulf %24, %26 : vector<8x512xf32>
    %29 = arith.subf %27, %28 : vector<8x512xf32>
    %c0_22 = arith.constant 0 : index
    %c512_23 = arith.constant 512 : index
    %30 = vector.load %arg5[%c0_22, %c512_23] : memref<8x2048xf32, #tpu.memory_space<vmem>>, vector<8x512xf32>
    tpu.vector_store %arg5[%c0_22, %c512_23], %29 {strides = array<i32>} : memref<8x2048xf32, #tpu.memory_space<vmem>>, vector<8x512xf32>,
    %31 = arith.mulf %24, %25 : vector<8x512xf32>
    %32 = arith.mulf %23, %26 : vector<8x512xf32>
    %33 = arith.addf %31, %32 : vector<8x512xf32>
    %c0_24 = arith.constant 0 : index
    %c1536 = arith.constant 1536 : index
    %34 = vector.load %arg5[%c0_24, %c1536] : memref<8x2048xf32, #tpu.memory_space<vmem>>, vector<8x512xf32>
    tpu.vector_store %arg5[%c0_24, %c1536], %33 {strides = array<i32>} : memref<8x2048xf32, #tpu.memory_space<vmem>>, vector<8x512xf32>,
    return
  }
  func.func @transform_0(%arg0: i32) -> (i32, i32) {
    %c0_i32 = arith.constant 0 : i32
    %c0_i32_0 = arith.constant 0 : i32
    return %arg0, %c0_i32 : i32, i32
  }
  func.func @transform_1(%arg0: i32) -> (i32, i32) {
    %c0_i32 = arith.constant 0 : i32
    %c0_i32_0 = arith.constant 0 : i32
    %c0_i32_1 = arith.constant 0 : i32
    return %c0_i32, %c0_i32_0 : i32, i32
  }
  func.func @transform_2(%arg0: i32) -> (i32, i32) {
    %c0_i32 = arith.constant 0 : i32
    %c0_i32_0 = arith.constant 0 : i32
    %c0_i32_1 = arith.constant 0 : i32
    return %c0_i32, %c0_i32_0 : i32, i32
  }
  func.func @transform_3(%arg0: i32) -> (i32, i32) {
    %c0_i32 = arith.constant 0 : i32
    %c0_i32_0 = arith.constant 0 : i32
    %c0_i32_1 = arith.constant 0 : i32
    return %c0_i32, %c0_i32_0 : i32, i32
  }
  func.func @transform_4(%arg0: i32) -> (i32, i32) {
    %c0_i32 = arith.constant 0 : i32
    %c0_i32_0 = arith.constant 0 : i32
    return %arg0, %c0_i32 : i32, i32
  }
}

</mosaic_0001>

<llo_original>
// kernel: tpu_custom_call.1
$region0: #{tpu_custom_call.1}
  #allocation0 [shape = 'u32[]', space=smem, size = 0x4, offset = 0x4, fixed_abs, tag = 'smem constant byte address 0x4 - core index']
  #allocation1 [shape = 'u32[72,128]{1,0:T(1,128)}', space=vmem, size = 0x9000, scoped, tag = 'internal scratch']
  %s0 = inlined_call_operand.vmem [shape: f32[8,2], index: 0, kind: input, shape index: {}]
  %s1 = inlined_call_operand.vmem [shape: f32[2,64], index: 1, kind: input, shape index: {}]
  %s2 = inlined_call_operand.hbm [shape: f32[64,1024], index: 2, kind: input, shape index: {}]
  %s3 = inlined_call_operand.hbm [shape: f32[64,1024], index: 3, kind: input, shape index: {}]
  %s4 = inlined_call_operand.hbm [shape: f32[8,2048], index: 4, kind: output, shape index: {}]
  %s5 = sld [smem:[#allocation0]]
  $region34: #{tpu_custom_call.1} parent=0
    _
  %s7 = ssub.s32 1, %s5
  %s8 = scalar_select 0, %s7, %s5
  $region1: #{tpu_custom_call.1} parent=0
    #allocation2 [shape = 'u8[262144]{0}', space=vmem, size = 0x40000, scoped, tag = 'input window, operand 2, single buffered']
    #allocation3 [shape = 's32[1]{0}', space=sflag, size = 0x4, scoped, tag = 'scoped memory for tpu_custom_call.1']
    #allocation4 [shape = 's32[1]{0}', space=sflag, size = 0x4, scoped, tag = 'scoped memory for tpu_custom_call.1']
    #allocation5 [shape = 'u8[262144]{0}', space=vmem, size = 0x40000, scoped, tag = 'input window, operand 3, single buffered']
    #allocation6 [shape = 's32[1]{0}', space=sflag, size = 0x4, scoped, tag = 'scoped memory for tpu_custom_call.1']
    #allocation7 [shape = 'u8[65536]{0}', space=vmem, size = 0x10000, scoped, tag = 'output window, operand 0, single buffered']
    %9 = vsyncpa [#allocation3], 0
    %10 = vsyncpa [#allocation6], 0
    %11 = vsyncpa [#allocation4], 0
    // Predicated region
    $region2: #{tpu_custom_call.1} parent=1 // pred_check
      _
    $region3: #{tpu_custom_call.1} parent=1 // pred_check_branch
      %13 = sbr.rel (0) target = $region5
    $region4: #{tpu_custom_call.1} parent=1 // pred_region
      _
    $region5: #{tpu_custom_call.1} parent=1 // pred_fallthru
      _
    // Predicated region
    $region6: #{tpu_custom_call.1} parent=1 // pred_check
      _
    $region7: #{tpu_custom_call.1} parent=1 // pred_check_branch
      %15 = sbr.rel (0) target = $region9
    $region8: #{tpu_custom_call.1} parent=1 // pred_region
      _
    $region9: #{tpu_custom_call.1} parent=1 // pred_fallthru
      _
    // Predicated region
    $region10: #{tpu_custom_call.1} parent=1 // pred_check
      _
    $region11: #{tpu_custom_call.1} parent=1 // pred_check_branch
      %17 = sbr.rel (0) target = $region13
    $region12: #{tpu_custom_call.1} parent=1 // pred_region
      %19 = vsyncadd [#allocation3], 0
      %s20 = sshll.u32 %s2, 4
      %s21 = int_to_ptr.hbm [resolvable:$true] %s20
      %s22 = sshll.u32 [#allocation2], 4
      %s23 = int_to_ptr.vmem [resolvable:$true] %s22
      %28 = dma.hbm_to_vmem [thread:$0]  %s21, 8192, %s23, [#allocation3], 1024, 1024, 64
    $region13: #{tpu_custom_call.1} parent=1 // pred_fallthru
      _
    // Predicated region
    $region14: #{tpu_custom_call.1} parent=1 // pred_check
      _
    $region15: #{tpu_custom_call.1} parent=1 // pred_check_branch
      %30 = sbr.rel (0) target = $region17
    $region16: #{tpu_custom_call.1} parent=1 // pred_region
      %32 = vsyncadd [#allocation6], 0
      %s33 = sshll.u32 %s3, 4
      %s34 = int_to_ptr.hbm [resolvable:$true] %s33
      %s35 = sshll.u32 [#allocation5], 4
      %s36 = int_to_ptr.vmem [resolvable:$true] %s35
      %41 = dma.hbm_to_vmem [thread:$0]  %s34, 8192, %s36, [#allocation6], 1024, 1024, 64
    $region17: #{tpu_custom_call.1} parent=1 // pred_fallthru
      _
    // Predicated region
    $region18: #{tpu_custom_call.1} parent=1 // pred_check
      _
    $region19: #{tpu_custom_call.1} parent=1 // pred_check_branch
      %43 = sbr.rel (0) target = $region21
    $region20: #{tpu_custom_call.1} parent=1 // pred_region
      %45 = dma.done [#allocation3], 8192
    $region21: #{tpu_custom_call.1} parent=1 // pred_fallthru
      _
    // Predicated region
    $region22: #{tpu_custom_call.1} parent=1 // pred_check
      _
    $region23: #{tpu_custom_call.1} parent=1 // pred_check_branch
      %47 = sbr.rel (0) target = $region25
    $region24: #{tpu_custom_call.1} parent=1 // pred_region
      %49 = dma.done [#allocation6], 8192
    $region25: #{tpu_custom_call.1} parent=1 // pred_fallthru
      _
    %v50 = vld [vmem:[%s0] sm:$0xff]
    %v51 = vadd.f32 %v50, 0.2
    %v52 = vld [vmem:[%s1] sm:$0x3]
    %vm53 = vcmask 15360
    %v55 = vsel %vm53, %v51, 0
    %vm57 = vcmask 1041408
    %v59 = vsel %vm57, %v52, 0
    %61 = vmatpush.msra.mxu0 0.0
    %62 = vmatpush.msra.mxu0 0.0
    %63 = vmatpush.msra.mxu0 0.0
    %64 = vmatpush.msra.mxu0 0.0
    %65 = vmatpush.msra.mxu0 0.0
    %66 = vmatpush.msra.mxu0 0.0
    %67 = vmatpush.msra.mxu0 0.0
    %68 = vmatpush.msra.mxu0 0.0
    %69 = vmatpush.msra.mxu0 0.0
    %70 = vmatpush.msra.mxu0 0.0
    %71 = vmatpush.msra.mxu0 0.0
    %72 = vmatpush.msra.mxu0 0.0
    %73 = vmatpush.msra.mxu0 0.0
    %74 = vmatpush.msra.mxu0 0.0
    %75 = vmatpush.msra.mxu0 0.0
    %76 = vmatpush.msra.mxu0 %v59
    %77 = vmatmul.f32.gmra.mxu0 %v55
    %v78 = vpop.f32.mrf.mxu0
    %v79 = vadd.f32 0.0, %v78
    %80 = vdwg.mxu0
    %v81 = vand.u32 2147483647, %v79
    %vm82 = vcmp.le.f32.partialorder %v81, 0.7853982
    %vm83 = vcmp.lt.s32.totalorder %v79, 0
    %v84 = vand.u32 %v79, 2139095040
    %v85 = vshrl.u32 %v84, 23
    %v86 = vsub.s32 %v85, 127
    %v87 = vand.u32 2147483647, %v79
    %v88 = vand.u32 %v87, 8388607
    %v89 = vor.u32 %v88, 8388608
    %v90 = vsub.s32 0, %v89
    %v91 = vadd.s32 %v86, 1
    %vm92 = vcmp.gt.s32.totalorder %v91, 0
    %v93 = vsel %vm92, %v91, 0
    %v94 = vshrl.u32 %v93, 5
    %v95 = vand.u32 %v93, 31
    %v96 = vsub.s32 32, %v95
    %v97 = vshrl.u32 683565275, %v96
    %v98 = vshll.u32 683565275, %v95
    %v99 = vshrl.u32 2475754826, %v96
    %v100 = vor.u32 %v98, %v99
    %v101 = vshll.u32 2475754826, %v95
    %v102 = vshrl.u32 2131351028, %v96
    %v103 = vor.u32 %v101, %v102
    %v104 = vshll.u32 2131351028, %v95
    %v105 = vshrl.u32 2102212464, %v96
    %v106 = vor.u32 %v104, %v105
    %v107 = vshll.u32 2102212464, %v95
    %v108 = vshrl.u32 920167782, %v96
    %v109 = vor.u32 %v107, %v108
    %v110 = vshll.u32 920167782, %v95
    %v111 = vshrl.u32 1326507024, %v96
    %v112 = vor.u32 %v110, %v111
    %vm113 = vcmp.lt.s32.totalorder %v94, 1
    %vm114 = vcmp.lt.s32.totalorder %v94, 2
    %vm115 = vcmp.lt.s32.totalorder %v94, 3
    %vm116 = vcmp.lt.s32.totalorder %v94, 4
    %v117 = vsel %vm113, %v97, %v100
    %v118 = vsel %vm116, %v106, 2102212464
    %v119 = vsel %vm115, %v103, %v118
    %v120 = vsel %vm114, %v117, %v119
    %v121 = vsel %vm113, %v100, %v103
    %v122 = vsel %vm116, %v109, 920167782
    %v123 = vsel %vm115, %v106, %v122
    %v124 = vsel %vm114, %v121, %v123
    %v125 = vsel %vm113, %v103, %v106
    %v126 = vsel %vm116, %v112, 1326507024
    %v127 = vsel %vm115, %v109, %v126
    %v128 = vsel %vm114, %v125, %v127
    %v129 = vshll.u32 %v89, 8
    %v130 = vand.u32 %v129, 65535
    %v131 = vshrl.u32 %v129, 16
    %v132 = vand.u32 %v128, 65535
    %v133 = vshrl.u32 %v128, 16
    %v134 = vmul.u32 %v130, %v132
    %v135 = vmul.u32 %v130, %v133
    %v136 = vmul.u32 %v131, %v132
    %v137 = vmul.u32 %v131, %v133
    %v138 = vshll.u32 %v135, 16
    %v139 = vshrl.u32 %v135, 16
    %v140 = vshll.u32 %v136, 16
    %v141 = vshrl.u32 %v136, 16
    %vm142 = vc.u32 %v134, %v138
    %v143 = vsel %vm142, 1, 0
    %v144 = vadd.s32 %v134, %v138
    %v145 = vadd.s32 %v137, %v143
    %vm146 = vc.u32 %v144, %v140
    %v147 = vsel %vm146, 1, 0
    %v148 = vadd.s32 %v144, %v140
    %v149 = vadd.s32 %v145, %v147
    %v150 = vadd.s32 %v149, %v139
    %v151 = vadd.s32 %v150, %v141
    %v152 = vand.u32 %v129, 65535
    %v153 = vshrl.u32 %v129, 16
    %v154 = vand.u32 %v124, 65535
    %v155 = vshrl.u32 %v124, 16
    %v156 = vmul.u32 %v152, %v154
    %v157 = vmul.u32 %v152, %v155
    %v158 = vmul.u32 %v153, %v154
    %v159 = vmul.u32 %v153, %v155
    %v160 = vshll.u32 %v157, 16
    %v161 = vshrl.u32 %v157, 16
    %v162 = vshll.u32 %v158, 16
    %v163 = vshrl.u32 %v158, 16
    %vm164 = vc.u32 %v156, %v160
    %v165 = vsel %vm164, 1, 0
    %v166 = vadd.s32 %v156, %v160
    %v167 = vadd.s32 %v159, %v165
    %vm168 = vc.u32 %v166, %v162
    %v169 = vsel %vm168, 1, 0
    %v170 = vadd.s32 %v166, %v162
    %v171 = vadd.s32 %v167, %v169
    %v172 = vadd.s32 %v171, %v161
    %v173 = vadd.s32 %v172, %v163
    %v174 = vmul.u32 %v129, %v120
    %v175 = vadd.s32 %v151, %v170
    %vm176 = vc.u32 %v151, %v170
    %v177 = vadd.s32 %v173, 1
    %v178 = vsel %vm176, %v177, %v173
    %v179 = vadd.s32 %v174, %v178
    %v180 = vadd.s32 %v179, 536870912
    %v181 = vshrl.u32 %v180, 30
    %v182 = vshll.u32 %v181, 30
    %v183 = vsub.s32 %v179, %v182
    %vm184 = vcmp.lt.s32.totalorder %v183, 0
    %v185 = vsub.s32 0, %v183
    %v186 = vsel %vm184, %v185, %v183
    %v187 = vclz %v186
    %v188 = vsub.s32 %v187, 2
    %vm189 = vcmp.gt.s32.totalorder 0, %v188
    %v190 = vsel %vm189, 0, %v188
    %v191 = vsub.s32 32, %v190
    %v192 = vshll.u32 %v183, %v190
    %v193 = vshrl.u32 %v175, %v191
    %v194 = vor.u32 %v192, %v193
    %v195 = vsub.s32 4294967266, %v190
    %v196 = vadd.s32 %v195, 127
    %v197 = vshll.u32 %v196, 23
    %v198 = vor.u32 4788187, %v197
    %v199 = vand.u32 2147483647, %v198
    %v201 = vcvt.s32.f32 %v194
    %v202 = vmul.f32 %v201, %v199
    %v203 = vxor.u32 %v202, 2147483648
    %v204 = vsel %vm83, %v203, %v202
    %v205 = vsub.s32 4, %v181
    %v206 = vsel %vm83, %v205, %v181
    %v207 = vsel %vm82, %v79, %v204
    %v208 = vsel %vm82, 0, %v206
    %v209 = vmul.f32 %v207, %v207
    %v210 = vmul.f32 %v209, -0.001358992
    %v211 = vadd.f32 %v210, 0.041655596
    %v212 = vmul.f32 %v209, %v211
    %v213 = vadd.f32 %v212, -0.4999988
    %v214 = vmul.f32 %v209, %v213
    %v215 = vadd.f32 1.0, %v214
    %v216 = vmul.f32 %v207, %v207
    %v217 = vmul.f32 %v216, -0.00019511016
    %v218 = vadd.f32 %v217, 0.008332121
    %v219 = vmul.f32 %v216, %v218
    %v220 = vadd.f32 %v219, -0.16666654
    %v221 = vmul.f32 %v216, %v220
    %v222 = vadd.f32 %v221, 1.0
    %v223 = vmul.f32 %v222, %v207
    %vm224 = vweird.f32 %v79
    %v225 = vand.u32 %v208, 3
    %vm226 = vcmp.lt.s32.totalorder %v225, 2
    %vm227 = vcmp.eq.s32.totalorder %v225, 0
    %v228 = vxor.u32 %v223, 2147483648
    %v229 = vsel %vm227, %v215, %v228
    %vm230 = vcmp.eq.s32.totalorder %v225, 2
    %v231 = vxor.u32 %v215, 2147483648
    %v232 = vsel %vm230, %v231, %v223
    %v233 = vsel %vm226, %v229, %v232
    %v234 = vsel %vm224, nan, %v233
    %v235 = vand.u32 2147483647, %v79
    %vm236 = vcmp.le.f32.partialorder %v235, 0.7853982
    %vm237 = vcmp.lt.s32.totalorder %v79, 0
    %v238 = vand.u32 %v79, 2139095040
    %v239 = vshrl.u32 %v238, 23
    %v240 = vsub.s32 %v239, 127
    %v241 = vand.u32 2147483647, %v79
    %v242 = vand.u32 %v241, 8388607
    %v243 = vor.u32 %v242, 8388608
    %v244 = vsub.s32 0, %v243
    %v245 = vadd.s32 %v240, 1
    %vm246 = vcmp.gt.s32.totalorder %v245, 0
    %v247 = vsel %vm246, %v245, 0
    %v248 = vshrl.u32 %v247, 5
    %v249 = vand.u32 %v247, 31
    %v250 = vsub.s32 32, %v249
    %v251 = vshrl.u32 683565275, %v250
    %v252 = vshll.u32 683565275, %v249
    %v253 = vshrl.u32 2475754826, %v250
    %v254 = vor.u32 %v252, %v253
    %v255 = vshll.u32 2475754826, %v249
    %v256 = vshrl.u32 2131351028, %v250
    %v257 = vor.u32 %v255, %v256
    %v258 = vshll.u32 2131351028, %v249
    %v259 = vshrl.u32 2102212464, %v250
    %v260 = vor.u32 %v258, %v259
    %v261 = vshll.u32 2102212464, %v249
    %v262 = vshrl.u32 920167782, %v250
    %v263 = vor.u32 %v261, %v262
    %v264 = vshll.u32 920167782, %v249
    %v265 = vshrl.u32 1326507024, %v250
    %v266 = vor.u32 %v264, %v265
    %vm267 = vcmp.lt.s32.totalorder %v248, 1
    %vm268 = vcmp.lt.s32.totalorder %v248, 2
    %vm269 = vcmp.lt.s32.totalorder %v248, 3
    %vm270 = vcmp.lt.s32.totalorder %v248, 4
    %v271 = vsel %vm267, %v251, %v254
    %v272 = vsel %vm270, %v260, 2102212464
    %v273 = vsel %vm269, %v257, %v272
    %v274 = vsel %vm268, %v271, %v273
    %v275 = vsel %vm267, %v254, %v257
    %v276 = vsel %vm270, %v263, 920167782
    %v277 = vsel %vm269, %v260, %v276
    %v278 = vsel %vm268, %v275, %v277
    %v279 = vsel %vm267, %v257, %v260
    %v280 = vsel %vm270, %v266, 1326507024
    %v281 = vsel %vm269, %v263, %v280
    %v282 = vsel %vm268, %v279, %v281
    %v283 = vshll.u32 %v243, 8
    %v284 = vand.u32 %v283, 65535
    %v285 = vshrl.u32 %v283, 16
    %v286 = vand.u32 %v282, 65535
    %v287 = vshrl.u32 %v282, 16
    %v288 = vmul.u32 %v284, %v286
    %v289 = vmul.u32 %v284, %v287
    %v290 = vmul.u32 %v285, %v286
    %v291 = vmul.u32 %v285, %v287
    %v292 = vshll.u32 %v289, 16
    %v293 = vshrl.u32 %v289, 16
    %v294 = vshll.u32 %v290, 16
    %v295 = vshrl.u32 %v290, 16
    %vm296 = vc.u32 %v288, %v292
    %v297 = vsel %vm296, 1, 0
    %v298 = vadd.s32 %v288, %v292
    %v299 = vadd.s32 %v291, %v297
    %vm300 = vc.u32 %v298, %v294
    %v301 = vsel %vm300, 1, 0
    %v302 = vadd.s32 %v298, %v294
    %v303 = vadd.s32 %v299, %v301
    %v304 = vadd.s32 %v303, %v293
    %v305 = vadd.s32 %v304, %v295
    %v306 = vand.u32 %v283, 65535
    %v307 = vshrl.u32 %v283, 16
    %v308 = vand.u32 %v278, 65535
    %v309 = vshrl.u32 %v278, 16
    %v310 = vmul.u32 %v306, %v308
    %v311 = vmul.u32 %v306, %v309
    %v312 = vmul.u32 %v307, %v308
    %v313 = vmul.u32 %v307, %v309
    %v314 = vshll.u32 %v311, 16
    %v315 = vshrl.u32 %v311, 16
    %v316 = vshll.u32 %v312, 16
    %v317 = vshrl.u32 %v312, 16
    %vm318 = vc.u32 %v310, %v314
    %v319 = vsel %vm318, 1, 0
    %v320 = vadd.s32 %v310, %v314
    %v321 = vadd.s32 %v313, %v319
    %vm322 = vc.u32 %v320, %v316
    %v323 = vsel %vm322, 1, 0
    %v324 = vadd.s32 %v320, %v316
    %v325 = vadd.s32 %v321, %v323
    %v326 = vadd.s32 %v325, %v315
    %v327 = vadd.s32 %v326, %v317
    %v328 = vmul.u32 %v283, %v274
    %v329 = vadd.s32 %v305, %v324
    %vm330 = vc.u32 %v305, %v324
    %v331 = vadd.s32 %v327, 1
    %v332 = vsel %vm330, %v331, %v327
    %v333 = vadd.s32 %v328, %v332
    %v334 = vadd.s32 %v333, 536870912
    %v335 = vshrl.u32 %v334, 30
    %v336 = vshll.u32 %v335, 30
    %v337 = vsub.s32 %v333, %v336
    %vm338 = vcmp.lt.s32.totalorder %v337, 0
    %v339 = vsub.s32 0, %v337
    %v340 = vsel %vm338, %v339, %v337
    %v341 = vclz %v340
    %v342 = vsub.s32 %v341, 2
    %vm343 = vcmp.gt.s32.totalorder 0, %v342
    %v344 = vsel %vm343, 0, %v342
    %v345 = vsub.s32 32, %v344
    %v346 = vshll.u32 %v337, %v344
    %v347 = vshrl.u32 %v329, %v345
    %v348 = vor.u32 %v346, %v347
    %v349 = vsub.s32 4294967266, %v344
    %v350 = vadd.s32 %v349, 127
    %v351 = vshll.u32 %v350, 23
    %v352 = vor.u32 4788187, %v351
    %v353 = vand.u32 2147483647, %v352
    %v355 = vcvt.s32.f32 %v348
    %v356 = vmul.f32 %v355, %v353
    %v357 = vxor.u32 %v356, 2147483648
    %v358 = vsel %vm237, %v357, %v356
    %v359 = vsub.s32 4, %v335
    %v360 = vsel %vm237, %v359, %v335
    %v361 = vsel %vm236, %v79, %v358
    %v362 = vsel %vm236, 0, %v360
    %v363 = vmul.f32 %v361, %v361
    %v364 = vmul.f32 %v363, -0.001358992
    %v365 = vadd.f32 %v364, 0.041655596
    %v366 = vmul.f32 %v363, %v365
    %v367 = vadd.f32 %v366, -0.4999988
    %v368 = vmul.f32 %v363, %v367
    %v369 = vadd.f32 1.0, %v368
    %v370 = vmul.f32 %v361, %v361
    %v371 = vmul.f32 %v370, -0.00019511016
    %v372 = vadd.f32 %v371, 0.008332121
    %v373 = vmul.f32 %v370, %v372
    %v374 = vadd.f32 %v373, -0.16666654
    %v375 = vmul.f32 %v370, %v374
    %v376 = vadd.f32 %v375, 1.0
    %v377 = vmul.f32 %v376, %v361
    %vm378 = vweird.f32 %v79
    %v379 = vadd.s32 %v362, 3
    %v380 = vand.u32 %v379, 3
    %vm381 = vcmp.lt.s32.totalorder %v380, 2
    %vm382 = vcmp.eq.s32.totalorder %v380, 0
    %v383 = vxor.u32 %v377, 2147483648
    %v384 = vsel %vm382, %v369, %v383
    %vm385 = vcmp.eq.s32.totalorder %v380, 2
    %v386 = vxor.u32 %v369, 2147483648
    %v387 = vsel %vm385, %v386, %v377
    %v388 = vsel %vm381, %v384, %v387
    %v389 = vsel %vm378, nan, %v388
    %v390 = vld [vmem:[#allocation2] sm:$0xff]
    %v391 = vld [vmem:[#allocation2 + $0x8] sm:$0xff]
    %v392 = vld [vmem:[#allocation2 + $0x10] sm:$0xff]
    %v393 = vld [vmem:[#allocation2 + $0x18] sm:$0xff]
    %v394 = vld [vmem:[#allocation2 + $0x40] sm:$0xff]
    %v395 = vld [vmem:[#allocation2 + $0x48] sm:$0xff]
    %v396 = vld [vmem:[#allocation2 + $0x50] sm:$0xff]
    %v397 = vld [vmem:[#allocation2 + $0x58] sm:$0xff]
    %v398 = vld [vmem:[#allocation2 + $0x80] sm:$0xff]
    %v399 = vld [vmem:[#allocation2 + $0x88] sm:$0xff]
    %v400 = vld [vmem:[#allocation2 + $0x90] sm:$0xff]
    %v401 = vld [vmem:[#allocation2 + $0x98] sm:$0xff]
    %v402 = vld [vmem:[#allocation2 + $0xc0] sm:$0xff]
    %v403 = vld [vmem:[#allocation2 + $0xc8] sm:$0xff]
    %v404 = vld [vmem:[#allocation2 + $0xd0] sm:$0xff]
    %v405 = vld [vmem:[#allocation2 + $0xd8] sm:$0xff]
    %v406 = vld [vmem:[#allocation2 + $0x100] sm:$0xff]
    %v407 = vld [vmem:[#allocation2 + $0x108] sm:$0xff]
    %v408 = vld [vmem:[#allocation2 + $0x110] sm:$0xff]
    %v409 = vld [vmem:[#allocation2 + $0x118] sm:$0xff]
    %v410 = vld [vmem:[#allocation2 + $0x140] sm:$0xff]
    %v411 = vld [vmem:[#allocation2 + $0x148] sm:$0xff]
    %v412 = vld [vmem:[#allocation2 + $0x150] sm:$0xff]
    %v413 = vld [vmem:[#allocation2 + $0x158] sm:$0xff]
    %v414 = vld [vmem:[#allocation2 + $0x180] sm:$0xff]
    %v415 = vld [vmem:[#allocation2 + $0x188] sm:$0xff]
    %v416 = vld [vmem:[#allocation2 + $0x190] sm:$0xff]
    %v417 = vld [vmem:[#allocation2 + $0x198] sm:$0xff]
    %v418 = vld [vmem:[#allocation2 + $0x1c0] sm:$0xff]
    %v419 = vld [vmem:[#allocation2 + $0x1c8] sm:$0xff]
    %v420 = vld [vmem:[#allocation2 + $0x1d0] sm:$0xff]
    %v421 = vld [vmem:[#allocation2 + $0x1d8] sm:$0xff]
    %v422 = vld [vmem:[#allocation5] sm:$0xff]
    %v423 = vld [vmem:[#allocation5 + $0x8] sm:$0xff]
    %v424 = vld [vmem:[#allocation5 + $0x10] sm:$0xff]
    %v425 = vld [vmem:[#allocation5 + $0x18] sm:$0xff]
    %v426 = vld [vmem:[#allocation5 + $0x40] sm:$0xff]
    %v427 = vld [vmem:[#allocation5 + $0x48] sm:$0xff]
    %v428 = vld [vmem:[#allocation5 + $0x50] sm:$0xff]
    %v429 = vld [vmem:[#allocation5 + $0x58] sm:$0xff]
    %v430 = vld [vmem:[#allocation5 + $0x80] sm:$0xff]
    %v431 = vld [vmem:[#allocation5 + $0x88] sm:$0xff]
    %v432 = vld [vmem:[#allocation5 + $0x90] sm:$0xff]
    %v433 = vld [vmem:[#allocation5 + $0x98] sm:$0xff]
    %v434 = vld [vmem:[#allocation5 + $0xc0] sm:$0xff]
    %v435 = vld [vmem:[#allocation5 + $0xc8] sm:$0xff]
    %v436 = vld [vmem:[#allocation5 + $0xd0] sm:$0xff]
    %v437 = vld [vmem:[#allocation5 + $0xd8] sm:$0xff]
    %v438 = vld [vmem:[#allocation5 + $0x100] sm:$0xff]
    %v439 = vld [vmem:[#allocation5 + $0x108] sm:$0xff]
    %v440 = vld [vmem:[#allocation5 + $0x110] sm:$0xff]
    %v441 = vld [vmem:[#allocation5 + $0x118] sm:$0xff]
    %v442 = vld [vmem:[#allocation5 + $0x140] sm:$0xff]
    %v443 = vld [vmem:[#allocation5 + $0x148] sm:$0xff]
    %v444 = vld [vmem:[#allocation5 + $0x150] sm:$0xff]
    %v445 = vld [vmem:[#allocation5 + $0x158] sm:$0xff]
    %v446 = vld [vmem:[#allocation5 + $0x180] sm:$0xff]
    %v447 = vld [vmem:[#allocation5 + $0x188] sm:$0xff]
    %v448 = vld [vmem:[#allocation5 + $0x190] sm:$0xff]
    %v449 = vld [vmem:[#allocation5 + $0x198] sm:$0xff]
    %v450 = vld [vmem:[#allocation5 + $0x1c0] sm:$0xff]
    %v451 = vld [vmem:[#allocation5 + $0x1c8] sm:$0xff]
    %v452 = vld [vmem:[#allocation5 + $0x1d0] sm:$0xff]
    %v453 = vld [vmem:[#allocation5 + $0x1d8] sm:$0xff]
    %vm454 = vcmask 523264
    %v456 = vsel %vm454, %v234, 0
    %458 = vmatpush.msra.mxu0 0.0
    %459 = vmatpush.msra.mxu0 0.0
    %460 = vmatpush.msra.mxu0 0.0
    %461 = vmatpush.msra.mxu0 0.0
    %462 = vmatpush.msra.mxu0 0.0
    %463 = vmatpush.msra.mxu0 0.0
    %464 = vmatpush.msra.mxu0 0.0
    %465 = vmatpush.msra.mxu0 0.0
    %466 = vmatpush.msra.mxu0 %v418
    %467 = vmatpush.msra.mxu0 %v414
    %468 = vmatpush.msra.mxu0 %v410
    %469 = vmatpush.msra.mxu0 %v406
    %470 = vmatpush.msra.mxu0 %v402
    %471 = vmatpush.msra.mxu0 %v398
    %472 = vmatpush.msra.mxu0 %v394
    %473 = vmatpush.msra.mxu0 %v390
    %474 = vmatmul.f32.gmra.mxu0 %v456
    %v475 = vpop.f32.mrf.mxu0
    %v476 = vadd.f32 0.0, %v475
    %477 = vdwg.mxu0
    %478 = vmatpush.msra.mxu0 0.0
    %479 = vmatpush.msra.mxu0 0.0
    %480 = vmatpush.msra.mxu0 0.0
    %481 = vmatpush.msra.mxu0 0.0
    %482 = vmatpush.msra.mxu0 0.0
    %483 = vmatpush.msra.mxu0 0.0
    %484 = vmatpush.msra.mxu0 0.0
    %485 = vmatpush.msra.mxu0 0.0
    %486 = vmatpush.msra.mxu0 %v419
    %487 = vmatpush.msra.mxu0 %v415
    %488 = vmatpush.msra.mxu0 %v411
    %489 = vmatpush.msra.mxu0 %v407
    %490 = vmatpush.msra.mxu0 %v403
    %491 = vmatpush.msra.mxu0 %v399
    %492 = vmatpush.msra.mxu0 %v395
    %493 = vmatpush.msra.mxu0 %v391
    %494 = vmatmul.f32.gmra.mxu0 %v456
    %v495 = vpop.f32.mrf.mxu0
    %v496 = vadd.f32 0.0, %v495
    %497 = vdwg.mxu0
    %498 = vmatpush.msra.mxu0 0.0
    %499 = vmatpush.msra.mxu0 0.0
    %500 = vmatpush.msra.mxu0 0.0
    %501 = vmatpush.msra.mxu0 0.0
    %502 = vmatpush.msra.mxu0 0.0
    %503 = vmatpush.msra.mxu0 0.0
    %504 = vmatpush.msra.mxu0 0.0
    %505 = vmatpush.msra.mxu0 0.0
    %506 = vmatpush.msra.mxu0 %v420
    %507 = vmatpush.msra.mxu0 %v416
    %508 = vmatpush.msra.mxu0 %v412
    %509 = vmatpush.msra.mxu0 %v408
    %510 = vmatpush.msra.mxu0 %v404
    %511 = vmatpush.msra.mxu0 %v400
    %512 = vmatpush.msra.mxu0 %v396
    %513 = vmatpush.msra.mxu0 %v392
    %514 = vmatmul.f32.gmra.mxu0 %v456
    %v515 = vpop.f32.mrf.mxu0
    %v516 = vadd.f32 0.0, %v515
    %517 = vdwg.mxu0
    %518 = vmatpush.msra.mxu0 0.0
    %519 = vmatpush.msra.mxu0 0.0
    %520 = vmatpush.msra.mxu0 0.0
    %521 = vmatpush.msra.mxu0 0.0
    %522 = vmatpush.msra.mxu0 0.0
    %523 = vmatpush.msra.mxu0 0.0
    %524 = vmatpush.msra.mxu0 0.0
    %525 = vmatpush.msra.mxu0 0.0
    %526 = vmatpush.msra.mxu0 %v421
    %527 = vmatpush.msra.mxu0 %v417
    %528 = vmatpush.msra.mxu0 %v413
    %529 = vmatpush.msra.mxu0 %v409
    %530 = vmatpush.msra.mxu0 %v405
    %531 = vmatpush.msra.mxu0 %v401
    %532 = vmatpush.msra.mxu0 %v397
    %533 = vmatpush.msra.mxu0 %v393
    %534 = vmatmul.f32.gmra.mxu0 %v456
    %v535 = vpop.f32.mrf.mxu0
    %v536 = vadd.f32 0.0, %v535
    %537 = vdwg.mxu0
    %v539 = vsel %vm454, %v389, 0
    %541 = vmatpush.msra.mxu0 0.0
    %542 = vmatpush.msra.mxu0 0.0
    %543 = vmatpush.msra.mxu0 0.0
    %544 = vmatpush.msra.mxu0 0.0
    %545 = vmatpush.msra.mxu0 0.0
    %546 = vmatpush.msra.mxu0 0.0
    %547 = vmatpush.msra.mxu0 0.0
    %548 = vmatpush.msra.mxu0 0.0
    %549 = vmatpush.msra.mxu0 %v418
    %550 = vmatpush.msra.mxu0 %v414
    %551 = vmatpush.msra.mxu0 %v410
    %552 = vmatpush.msra.mxu0 %v406
    %553 = vmatpush.msra.mxu0 %v402
    %554 = vmatpush.msra.mxu0 %v398
    %555 = vmatpush.msra.mxu0 %v394
    %556 = vmatpush.msra.mxu0 %v390
    %557 = vmatmul.f32.gmra.mxu0 %v539
    %v558 = vpop.f32.mrf.mxu0
    %v559 = vadd.f32 0.0, %v558
    %560 = vdwg.mxu0
    %561 = vmatpush.msra.mxu0 0.0
    %562 = vmatpush.msra.mxu0 0.0
    %563 = vmatpush.msra.mxu0 0.0
    %564 = vmatpush.msra.mxu0 0.0
    %565 = vmatpush.msra.mxu0 0.0
    %566 = vmatpush.msra.mxu0 0.0
    %567 = vmatpush.msra.mxu0 0.0
    %568 = vmatpush.msra.mxu0 0.0
    %569 = vmatpush.msra.mxu0 %v419
    %570 = vmatpush.msra.mxu0 %v415
    %571 = vmatpush.msra.mxu0 %v411
    %572 = vmatpush.msra.mxu0 %v407
    %573 = vmatpush.msra.mxu0 %v403
    %574 = vmatpush.msra.mxu0 %v399
    %575 = vmatpush.msra.mxu0 %v395
    %576 = vmatpush.msra.mxu0 %v391
    %577 = vmatmul.f32.gmra.mxu0 %v539
    %v578 = vpop.f32.mrf.mxu0
    %v579 = vadd.f32 0.0, %v578
    %580 = vdwg.mxu0
    %581 = vmatpush.msra.mxu0 0.0
    %582 = vmatpush.msra.mxu0 0.0
    %583 = vmatpush.msra.mxu0 0.0
    %584 = vmatpush.msra.mxu0 0.0
    %585 = vmatpush.msra.mxu0 0.0
    %586 = vmatpush.msra.mxu0 0.0
    %587 = vmatpush.msra.mxu0 0.0
    %588 = vmatpush.msra.mxu0 0.0
    %589 = vmatpush.msra.mxu0 %v420
    %590 = vmatpush.msra.mxu0 %v416
    %591 = vmatpush.msra.mxu0 %v412
    %592 = vmatpush.msra.mxu0 %v408
    %593 = vmatpush.msra.mxu0 %v404
    %594 = vmatpush.msra.mxu0 %v400
    %595 = vmatpush.msra.mxu0 %v396
    %596 = vmatpush.msra.mxu0 %v392
    %597 = vmatmul.f32.gmra.mxu0 %v539
    %v598 = vpop.f32.mrf.mxu0
    %v599 = vadd.f32 0.0, %v598
    %600 = vdwg.mxu0
    %601 = vmatpush.msra.mxu0 0.0
    %602 = vmatpush.msra.mxu0 0.0
    %603 = vmatpush.msra.mxu0 0.0
    %604 = vmatpush.msra.mxu0 0.0
    %605 = vmatpush.msra.mxu0 0.0
    %606 = vmatpush.msra.mxu0 0.0
    %607 = vmatpush.msra.mxu0 0.0
    %608 = vmatpush.msra.mxu0 0.0
    %609 = vmatpush.msra.mxu0 %v421
    %610 = vmatpush.msra.mxu0 %v417
    %611 = vmatpush.msra.mxu0 %v413
    %612 = vmatpush.msra.mxu0 %v409
    %613 = vmatpush.msra.mxu0 %v405
    %614 = vmatpush.msra.mxu0 %v401
    %615 = vmatpush.msra.mxu0 %v397
    %616 = vmatpush.msra.mxu0 %v393
    %617 = vmatmul.f32.gmra.mxu0 %v539
    %v618 = vpop.f32.mrf.mxu0
    %v619 = vadd.f32 0.0, %v618
    %620 = vdwg.mxu0
    %621 = vmatpush.msra.mxu0 0.0
    %622 = vmatpush.msra.mxu0 0.0
    %623 = vmatpush.msra.mxu0 0.0
    %624 = vmatpush.msra.mxu0 0.0
    %625 = vmatpush.msra.mxu0 0.0
    %626 = vmatpush.msra.mxu0 0.0
    %627 = vmatpush.msra.mxu0 0.0
    %628 = vmatpush.msra.mxu0 0.0
    %629 = vmatpush.msra.mxu0 %v450
    %630 = vmatpush.msra.mxu0 %v446
    %631 = vmatpush.msra.mxu0 %v442
    %632 = vmatpush.msra.mxu0 %v438
    %633 = vmatpush.msra.mxu0 %v434
    %634 = vmatpush.msra.mxu0 %v430
    %635 = vmatpush.msra.mxu0 %v426
    %636 = vmatpush.msra.mxu0 %v422
    %637 = vmatmul.f32.gmra.mxu0 %v456
    %v638 = vpop.f32.mrf.mxu0
    %v639 = vadd.f32 0.0, %v638
    %640 = vdwg.mxu0
    %641 = vmatpush.msra.mxu0 0.0
    %642 = vmatpush.msra.mxu0 0.0
    %643 = vmatpush.msra.mxu0 0.0
    %644 = vmatpush.msra.mxu0 0.0
    %645 = vmatpush.msra.mxu0 0.0
    %646 = vmatpush.msra.mxu0 0.0
    %647 = vmatpush.msra.mxu0 0.0
    %648 = vmatpush.msra.mxu0 0.0
    %649 = vmatpush.msra.mxu0 %v451
    %650 = vmatpush.msra.mxu0 %v447
    %651 = vmatpush.msra.mxu0 %v443
    %652 = vmatpush.msra.mxu0 %v439
    %653 = vmatpush.msra.mxu0 %v435
    %654 = vmatpush.msra.mxu0 %v431
    %655 = vmatpush.msra.mxu0 %v427
    %656 = vmatpush.msra.mxu0 %v423
    %657 = vmatmul.f32.gmra.mxu0 %v456
    %v658 = vpop.f32.mrf.mxu0
    %v659 = vadd.f32 0.0, %v658
    %660 = vdwg.mxu0
    %661 = vmatpush.msra.mxu0 0.0
    %662 = vmatpush.msra.mxu0 0.0
    %663 = vmatpush.msra.mxu0 0.0
    %664 = vmatpush.msra.mxu0 0.0
    %665 = vmatpush.msra.mxu0 0.0
    %666 = vmatpush.msra.mxu0 0.0
    %667 = vmatpush.msra.mxu0 0.0
    %668 = vmatpush.msra.mxu0 0.0
    %669 = vmatpush.msra.mxu0 %v452
    %670 = vmatpush.msra.mxu0 %v448
    %671 = vmatpush.msra.mxu0 %v444
    %672 = vmatpush.msra.mxu0 %v440
    %673 = vmatpush.msra.mxu0 %v436
    %674 = vmatpush.msra.mxu0 %v432
    %675 = vmatpush.msra.mxu0 %v428
    %676 = vmatpush.msra.mxu0 %v424
    %677 = vmatmul.f32.gmra.mxu0 %v456
    %v678 = vpop.f32.mrf.mxu0
    %v679 = vadd.f32 0.0, %v678
    %680 = vdwg.mxu0
    %681 = vmatpush.msra.mxu0 0.0
    %682 = vmatpush.msra.mxu0 0.0
    %683 = vmatpush.msra.mxu0 0.0
    %684 = vmatpush.msra.mxu0 0.0
    %685 = vmatpush.msra.mxu0 0.0
    %686 = vmatpush.msra.mxu0 0.0
    %687 = vmatpush.msra.mxu0 0.0
    %688 = vmatpush.msra.mxu0 0.0
    %689 = vmatpush.msra.mxu0 %v453
    %690 = vmatpush.msra.mxu0 %v449
    %691 = vmatpush.msra.mxu0 %v445
    %692 = vmatpush.msra.mxu0 %v441
    %693 = vmatpush.msra.mxu0 %v437
    %694 = vmatpush.msra.mxu0 %v433
    %695 = vmatpush.msra.mxu0 %v429
    %696 = vmatpush.msra.mxu0 %v425
    %697 = vmatmul.f32.gmra.mxu0 %v456
    %v698 = vpop.f32.mrf.mxu0
    %v699 = vadd.f32 0.0, %v698
    %700 = vdwg.mxu0
    %701 = vmatpush.msra.mxu0 0.0
    %702 = vmatpush.msra.mxu0 0.0
    %703 = vmatpush.msra.mxu0 0.0
    %704 = vmatpush.msra.mxu0 0.0
    %705 = vmatpush.msra.mxu0 0.0
    %706 = vmatpush.msra.mxu0 0.0
    %707 = vmatpush.msra.mxu0 0.0
    %708 = vmatpush.msra.mxu0 0.0
    %709 = vmatpush.msra.mxu0 %v450
    %710 = vmatpush.msra.mxu0 %v446
    %711 = vmatpush.msra.mxu0 %v442
    %712 = vmatpush.msra.mxu0 %v438
    %713 = vmatpush.msra.mxu0 %v434
    %714 = vmatpush.msra.mxu0 %v430
    %715 = vmatpush.msra.mxu0 %v426
    %716 = vmatpush.msra.mxu0 %v422
    %717 = vmatmul.f32.gmra.mxu0 %v539
    %v718 = vpop.f32.mrf.mxu0
    %v719 = vadd.f32 0.0, %v718
    %720 = vdwg.mxu0
    %721 = vmatpush.msra.mxu0 0.0
    %722 = vmatpush.msra.mxu0 0.0
    %723 = vmatpush.msra.mxu0 0.0
    %724 = vmatpush.msra.mxu0 0.0
    %725 = vmatpush.msra.mxu0 0.0
    %726 = vmatpush.msra.mxu0 0.0
    %727 = vmatpush.msra.mxu0 0.0
    %728 = vmatpush.msra.mxu0 0.0
    %729 = vmatpush.msra.mxu0 %v451
    %730 = vmatpush.msra.mxu0 %v447
    %731 = vmatpush.msra.mxu0 %v443
    %732 = vmatpush.msra.mxu0 %v439
    %733 = vmatpush.msra.mxu0 %v435
    %734 = vmatpush.msra.mxu0 %v431
    %735 = vmatpush.msra.mxu0 %v427
    %736 = vmatpush.msra.mxu0 %v423
    %737 = vmatmul.f32.gmra.mxu0 %v539
    %v738 = vpop.f32.mrf.mxu0
    %v739 = vadd.f32 0.0, %v738
    %740 = vdwg.mxu0
    %741 = vmatpush.msra.mxu0 0.0
    %742 = vmatpush.msra.mxu0 0.0
    %743 = vmatpush.msra.mxu0 0.0
    %744 = vmatpush.msra.mxu0 0.0
    %745 = vmatpush.msra.mxu0 0.0
    %746 = vmatpush.msra.mxu0 0.0
    %747 = vmatpush.msra.mxu0 0.0
    %748 = vmatpush.msra.mxu0 0.0
    %749 = vmatpush.msra.mxu0 %v452
    %750 = vmatpush.msra.mxu0 %v448
    %751 = vmatpush.msra.mxu0 %v444
    %752 = vmatpush.msra.mxu0 %v440
    %753 = vmatpush.msra.mxu0 %v436
    %754 = vmatpush.msra.mxu0 %v432
    %755 = vmatpush.msra.mxu0 %v428
    %756 = vmatpush.msra.mxu0 %v424
    %757 = vmatmul.f32.gmra.mxu0 %v539
    %v758 = vpop.f32.mrf.mxu0
    %v759 = vadd.f32 0.0, %v758
    %760 = vdwg.mxu0
    %761 = vmatpush.msra.mxu0 0.0
    %762 = vmatpush.msra.mxu0 0.0
    %763 = vmatpush.msra.mxu0 0.0
    %764 = vmatpush.msra.mxu0 0.0
    %765 = vmatpush.msra.mxu0 0.0
    %766 = vmatpush.msra.mxu0 0.0
    %767 = vmatpush.msra.mxu0 0.0
    %768 = vmatpush.msra.mxu0 0.0
    %769 = vmatpush.msra.mxu0 %v453
    %770 = vmatpush.msra.mxu0 %v449
    %771 = vmatpush.msra.mxu0 %v445
    %772 = vmatpush.msra.mxu0 %v441
    %773 = vmatpush.msra.mxu0 %v437
    %774 = vmatpush.msra.mxu0 %v433
    %775 = vmatpush.msra.mxu0 %v429
    %776 = vmatpush.msra.mxu0 %v425
    %777 = vmatmul.f32.gmra.mxu0 %v539
    %v778 = vpop.f32.mrf.mxu0
    %v779 = vadd.f32 0.0, %v778
    %780 = vdwg.mxu0
    %v781 = vmul.f32 %v476, %v639
    %v782 = vmul.f32 %v496, %v659
    %v783 = vmul.f32 %v516, %v679
    %v784 = vmul.f32 %v536, %v699
    %v785 = vmul.f32 %v559, %v719
    %v786 = vmul.f32 %v579, %v739
    %v787 = vmul.f32 %v599, %v759
    %v788 = vmul.f32 %v619, %v779
    %v789 = vsub.f32 %v781, %v785
    %v790 = vsub.f32 %v782, %v786
    %v791 = vsub.f32 %v783, %v787
    %v792 = vsub.f32 %v784, %v788
    %793 = vst [vmem:[#allocation7] sm:$0xff] %v789
    %794 = vst [vmem:[#allocation7 + $0x8] sm:$0xff] %v790
    %795 = vst [vmem:[#allocation7 + $0x10] sm:$0xff] %v791
    %796 = vst [vmem:[#allocation7 + $0x18] sm:$0xff] %v792
    %v797 = vmul.f32 %v559, %v639
    %v798 = vmul.f32 %v579, %v659
    %v799 = vmul.f32 %v599, %v679
    %v800 = vmul.f32 %v619, %v699
    %v801 = vmul.f32 %v476, %v719
    %v802 = vmul.f32 %v496, %v739
    %v803 = vmul.f32 %v516, %v759
    %v804 = vmul.f32 %v536, %v779
    %v805 = vadd.f32 %v797, %v801
    %v806 = vadd.f32 %v798, %v802
    %v807 = vadd.f32 %v799, %v803
    %v808 = vadd.f32 %v800, %v804
    %809 = vst [vmem:[#allocation7 + $0x40] sm:$0xff] %v805
    %810 = vst [vmem:[#allocation7 + $0x48] sm:$0xff] %v806
    %811 = vst [vmem:[#allocation7 + $0x50] sm:$0xff] %v807
    %812 = vst [vmem:[#allocation7 + $0x58] sm:$0xff] %v808
    %v813 = vld [vmem:[#allocation2 + $0x20] sm:$0xff]
    %v814 = vld [vmem:[#allocation2 + $0x28] sm:$0xff]
    %v815 = vld [vmem:[#allocation2 + $0x30] sm:$0xff]
    %v816 = vld [vmem:[#allocation2 + $0x38] sm:$0xff]
    %v817 = vld [vmem:[#allocation2 + $0x60] sm:$0xff]
    %v818 = vld [vmem:[#allocation2 + $0x68] sm:$0xff]
    %v819 = vld [vmem:[#allocation2 + $0x70] sm:$0xff]
    %v820 = vld [vmem:[#allocation2 + $0x78] sm:$0xff]
    %v821 = vld [vmem:[#allocation2 + $0xa0] sm:$0xff]
    %v822 = vld [vmem:[#allocation2 + $0xa8] sm:$0xff]
    %v823 = vld [vmem:[#allocation2 + $0xb0] sm:$0xff]
    %v824 = vld [vmem:[#allocation2 + $0xb8] sm:$0xff]
    %v825 = vld [vmem:[#allocation2 + $0xe0] sm:$0xff]
    %v826 = vld [vmem:[#allocation2 + $0xe8] sm:$0xff]
    %v827 = vld [vmem:[#allocation2 + $0xf0] sm:$0xff]
    %v828 = vld [vmem:[#allocation2 + $0xf8] sm:$0xff]
    %v829 = vld [vmem:[#allocation2 + $0x120] sm:$0xff]
    %v830 = vld [vmem:[#allocation2 + $0x128] sm:$0xff]
    %v831 = vld [vmem:[#allocation2 + $0x130] sm:$0xff]
    %v832 = vld [vmem:[#allocation2 + $0x138] sm:$0xff]
    %v833 = vld [vmem:[#allocation2 + $0x160] sm:$0xff]
    %v834 = vld [vmem:[#allocation2 + $0x168] sm:$0xff]
    %v835 = vld [vmem:[#allocation2 + $0x170] sm:$0xff]
    %v836 = vld [vmem:[#allocation2 + $0x178] sm:$0xff]
    %v837 = vld [vmem:[#allocation2 + $0x1a0] sm:$0xff]
    %v838 = vld [vmem:[#allocation2 + $0x1a8] sm:$0xff]
    %v839 = vld [vmem:[#allocation2 + $0x1b0] sm:$0xff]
    %v840 = vld [vmem:[#allocation2 + $0x1b8] sm:$0xff]
    %v841 = vld [vmem:[#allocation2 + $0x1e0] sm:$0xff]
    %v842 = vld [vmem:[#allocation2 + $0x1e8] sm:$0xff]
    %v843 = vld [vmem:[#allocation2 + $0x1f0] sm:$0xff]
    %v844 = vld [vmem:[#allocation2 + $0x1f8] sm:$0xff]
    %v845 = vld [vmem:[#allocation5 + $0x20] sm:$0xff]
    %v846 = vld [vmem:[#allocation5 + $0x28] sm:$0xff]
    %v847 = vld [vmem:[#allocation5 + $0x30] sm:$0xff]
    %v848 = vld [vmem:[#allocation5 + $0x38] sm:$0xff]
    %v849 = vld [vmem:[#allocation5 + $0x60] sm:$0xff]
    %v850 = vld [vmem:[#allocation5 + $0x68] sm:$0xff]
    %v851 = vld [vmem:[#allocation5 + $0x70] sm:$0xff]
    %v852 = vld [vmem:[#allocation5 + $0x78] sm:$0xff]
    %v853 = vld [vmem:[#allocation5 + $0xa0] sm:$0xff]
    %v854 = vld [vmem:[#allocation5 + $0xa8] sm:$0xff]
    %v855 = vld [vmem:[#allocation5 + $0xb0] sm:$0xff]
    %v856 = vld [vmem:[#allocation5 + $0xb8] sm:$0xff]
    %v857 = vld [vmem:[#allocation5 + $0xe0] sm:$0xff]
    %v858 = vld [vmem:[#allocation5 + $0xe8] sm:$0xff]
    %v859 = vld [vmem:[#allocation5 + $0xf0] sm:$0xff]
    %v860 = vld [vmem:[#allocation5 + $0xf8] sm:$0xff]
    %v861 = vld [vmem:[#allocation5 + $0x120] sm:$0xff]
    %v862 = vld [vmem:[#allocation5 + $0x128] sm:$0xff]
    %v863 = vld [vmem:[#allocation5 + $0x130] sm:$0xff]
    %v864 = vld [vmem:[#allocation5 + $0x138] sm:$0xff]
    %v865 = vld [vmem:[#allocation5 + $0x160] sm:$0xff]
    %v866 = vld [vmem:[#allocation5 + $0x168] sm:$0xff]
    %v867 = vld [vmem:[#allocation5 + $0x170] sm:$0xff]
    %v868 = vld [vmem:[#allocation5 + $0x178] sm:$0xff]
    %v869 = vld [vmem:[#allocation5 + $0x1a0] sm:$0xff]
    %v870 = vld [vmem:[#allocation5 + $0x1a8] sm:$0xff]
    %v871 = vld [vmem:[#allocation5 + $0x1b0] sm:$0xff]
    %v872 = vld [vmem:[#allocation5 + $0x1b8] sm:$0xff]
    %v873 = vld [vmem:[#allocation5 + $0x1e0] sm:$0xff]
    %v874 = vld [vmem:[#allocation5 + $0x1e8] sm:$0xff]
    %v875 = vld [vmem:[#allocation5 + $0x1f0] sm:$0xff]
    %v876 = vld [vmem:[#allocation5 + $0x1f8] sm:$0xff]
    %877 = vmatpush.msra.mxu0 0.0
    %878 = vmatpush.msra.mxu0 0.0
    %879 = vmatpush.msra.mxu0 0.0
    %880 = vmatpush.msra.mxu0 0.0
    %881 = vmatpush.msra.mxu0 0.0
    %882 = vmatpush.msra.mxu0 0.0
    %883 = vmatpush.msra.mxu0 0.0
    %884 = vmatpush.msra.mxu0 0.0
    %885 = vmatpush.msra.mxu0 %v841
    %886 = vmatpush.msra.mxu0 %v837
    %887 = vmatpush.msra.mxu0 %v833
    %888 = vmatpush.msra.mxu0 %v829
    %889 = vmatpush.msra.mxu0 %v825
    %890 = vmatpush.msra.mxu0 %v821
    %891 = vmatpush.msra.mxu0 %v817
    %892 = vmatpush.msra.mxu0 %v813
    %893 = vmatmul.f32.gmra.mxu0 %v456
    %v894 = vpop.f32.mrf.mxu0
    %v895 = vadd.f32 0.0, %v894
    %896 = vdwg.mxu0
    %897 = vmatpush.msra.mxu0 0.0
    %898 = vmatpush.msra.mxu0 0.0
    %899 = vmatpush.msra.mxu0 0.0
    %900 = vmatpush.msra.mxu0 0.0
    %901 = vmatpush.msra.mxu0 0.0
    %902 = vmatpush.msra.mxu0 0.0
    %903 = vmatpush.msra.mxu0 0.0
    %904 = vmatpush.msra.mxu0 0.0
    %905 = vmatpush.msra.mxu0 %v842
    %906 = vmatpush.msra.mxu0 %v838
    %907 = vmatpush.msra.mxu0 %v834
    %908 = vmatpush.msra.mxu0 %v830
    %909 = vmatpush.msra.mxu0 %v826
    %910 = vmatpush.msra.mxu0 %v822
    %911 = vmatpush.msra.mxu0 %v818
    %912 = vmatpush.msra.mxu0 %v814
    %913 = vmatmul.f32.gmra.mxu0 %v456
    %v914 = vpop.f32.mrf.mxu0
    %v915 = vadd.f32 0.0, %v914
    %916 = vdwg.mxu0
    %917 = vmatpush.msra.mxu0 0.0
    %918 = vmatpush.msra.mxu0 0.0
    %919 = vmatpush.msra.mxu0 0.0
    %920 = vmatpush.msra.mxu0 0.0
    %921 = vmatpush.msra.mxu0 0.0
    %922 = vmatpush.msra.mxu0 0.0
    %923 = vmatpush.msra.mxu0 0.0
    %924 = vmatpush.msra.mxu0 0.0
    %925 = vmatpush.msra.mxu0 %v843
    %926 = vmatpush.msra.mxu0 %v839
    %927 = vmatpush.msra.mxu0 %v835
    %928 = vmatpush.msra.mxu0 %v831
    %929 = vmatpush.msra.mxu0 %v827
    %930 = vmatpush.msra.mxu0 %v823
    %931 = vmatpush.msra.mxu0 %v819
    %932 = vmatpush.msra.mxu0 %v815
    %933 = vmatmul.f32.gmra.mxu0 %v456
    %v934 = vpop.f32.mrf.mxu0
    %v935 = vadd.f32 0.0, %v934
    %936 = vdwg.mxu0
    %937 = vmatpush.msra.mxu0 0.0
    %938 = vmatpush.msra.mxu0 0.0
    %939 = vmatpush.msra.mxu0 0.0
    %940 = vmatpush.msra.mxu0 0.0
    %941 = vmatpush.msra.mxu0 0.0
    %942 = vmatpush.msra.mxu0 0.0
    %943 = vmatpush.msra.mxu0 0.0
    %944 = vmatpush.msra.mxu0 0.0
    %945 = vmatpush.msra.mxu0 %v844
    %946 = vmatpush.msra.mxu0 %v840
    %947 = vmatpush.msra.mxu0 %v836
    %948 = vmatpush.msra.mxu0 %v832
    %949 = vmatpush.msra.mxu0 %v828
    %950 = vmatpush.msra.mxu0 %v824
    %951 = vmatpush.msra.mxu0 %v820
    %952 = vmatpush.msra.mxu0 %v816
    %953 = vmatmul.f32.gmra.mxu0 %v456
    %v954 = vpop.f32.mrf.mxu0
    %v955 = vadd.f32 0.0, %v954
    %956 = vdwg.mxu0
    %957 = vmatpush.msra.mxu0 0.0
    %958 = vmatpush.msra.mxu0 0.0
    %959 = vmatpush.msra.mxu0 0.0
    %960 = vmatpush.msra.mxu0 0.0
    %961 = vmatpush.msra.mxu0 0.0
    %962 = vmatpush.msra.mxu0 0.0
    %963 = vmatpush.msra.mxu0 0.0
    %964 = vmatpush.msra.mxu0 0.0
    %965 = vmatpush.msra.mxu0 %v841
    %966 = vmatpush.msra.mxu0 %v837
    %967 = vmatpush.msra.mxu0 %v833
    %968 = vmatpush.msra.mxu0 %v829
    %969 = vmatpush.msra.mxu0 %v825
    %970 = vmatpush.msra.mxu0 %v821
    %971 = vmatpush.msra.mxu0 %v817
    %972 = vmatpush.msra.mxu0 %v813
    %973 = vmatmul.f32.gmra.mxu0 %v539
    %v974 = vpop.f32.mrf.mxu0
    %v975 = vadd.f32 0.0, %v974
    %976 = vdwg.mxu0
    %977 = vmatpush.msra.mxu0 0.0
    %978 = vmatpush.msra.mxu0 0.0
    %979 = vmatpush.msra.mxu0 0.0
    %980 = vmatpush.msra.mxu0 0.0
    %981 = vmatpush.msra.mxu0 0.0
    %982 = vmatpush.msra.mxu0 0.0
    %983 = vmatpush.msra.mxu0 0.0
    %984 = vmatpush.msra.mxu0 0.0
    %985 = vmatpush.msra.mxu0 %v842
    %986 = vmatpush.msra.mxu0 %v838
    %987 = vmatpush.msra.mxu0 %v834
    %988 = vmatpush.msra.mxu0 %v830
    %989 = vmatpush.msra.mxu0 %v826
    %990 = vmatpush.msra.mxu0 %v822
    %991 = vmatpush.msra.mxu0 %v818
    %992 = vmatpush.msra.mxu0 %v814
    %993 = vmatmul.f32.gmra.mxu0 %v539
    %v994 = vpop.f32.mrf.mxu0
    %v995 = vadd.f32 0.0, %v994
    %996 = vdwg.mxu0
    %997 = vmatpush.msra.mxu0 0.0
    %998 = vmatpush.msra.mxu0 0.0
    %999 = vmatpush.msra.mxu0 0.0
    %1000 = vmatpush.msra.mxu0 0.0
    %1001 = vmatpush.msra.mxu0 0.0
    %1002 = vmatpush.msra.mxu0 0.0
    %1003 = vmatpush.msra.mxu0 0.0
    %1004 = vmatpush.msra.mxu0 0.0
    %1005 = vmatpush.msra.mxu0 %v843
    %1006 = vmatpush.msra.mxu0 %v839
    %1007 = vmatpush.msra.mxu0 %v835
    %1008 = vmatpush.msra.mxu0 %v831
    %1009 = vmatpush.msra.mxu0 %v827
    %1010 = vmatpush.msra.mxu0 %v823
    %1011 = vmatpush.msra.mxu0 %v819
    %1012 = vmatpush.msra.mxu0 %v815
    %1013 = vmatmul.f32.gmra.mxu0 %v539
    %v1014 = vpop.f32.mrf.mxu0
    %v1015 = vadd.f32 0.0, %v1014
    %1016 = vdwg.mxu0
    %1017 = vmatpush.msra.mxu0 0.0
    %1018 = vmatpush.msra.mxu0 0.0
    %1019 = vmatpush.msra.mxu0 0.0
    %1020 = vmatpush.msra.mxu0 0.0
    %1021 = vmatpush.msra.mxu0 0.0
    %1022 = vmatpush.msra.mxu0 0.0
    %1023 = vmatpush.msra.mxu0 0.0
    %1024 = vmatpush.msra.mxu0 0.0
    %1025 = vmatpush.msra.mxu0 %v844
    %1026 = vmatpush.msra.mxu0 %v840
    %1027 = vmatpush.msra.mxu0 %v836
    %1028 = vmatpush.msra.mxu0 %v832
    %1029 = vmatpush.msra.mxu0 %v828
    %1030 = vmatpush.msra.mxu0 %v824
    %1031 = vmatpush.msra.mxu0 %v820
    %1032 = vmatpush.msra.mxu0 %v816
    %1033 = vmatmul.f32.gmra.mxu0 %v539
    %v1034 = vpop.f32.mrf.mxu0
    %v1035 = vadd.f32 0.0, %v1034
    %1036 = vdwg.mxu0
    %1037 = vmatpush.msra.mxu0 0.0
    %1038 = vmatpush.msra.mxu0 0.0
    %1039 = vmatpush.msra.mxu0 0.0
    %1040 = vmatpush.msra.mxu0 0.0
    %1041 = vmatpush.msra.mxu0 0.0
    %1042 = vmatpush.msra.mxu0 0.0
    %1043 = vmatpush.msra.mxu0 0.0
    %1044 = vmatpush.msra.mxu0 0.0
    %1045 = vmatpush.msra.mxu0 %v873
    %1046 = vmatpush.msra.mxu0 %v869
    %1047 = vmatpush.msra.mxu0 %v865
    %1048 = vmatpush.msra.mxu0 %v861
    %1049 = vmatpush.msra.mxu0 %v857
    %1050 = vmatpush.msra.mxu0 %v853
    %1051 = vmatpush.msra.mxu0 %v849
    %1052 = vmatpush.msra.mxu0 %v845
    %1053 = vmatmul.f32.gmra.mxu0 %v456
    %v1054 = vpop.f32.mrf.mxu0
    %v1055 = vadd.f32 0.0, %v1054
    %1056 = vdwg.mxu0
    %1057 = vmatpush.msra.mxu0 0.0
    %1058 = vmatpush.msra.mxu0 0.0
    %1059 = vmatpush.msra.mxu0 0.0
    %1060 = vmatpush.msra.mxu0 0.0
    %1061 = vmatpush.msra.mxu0 0.0
    %1062 = vmatpush.msra.mxu0 0.0
    %1063 = vmatpush.msra.mxu0 0.0
    %1064 = vmatpush.msra.mxu0 0.0
    %1065 = vmatpush.msra.mxu0 %v874
    %1066 = vmatpush.msra.mxu0 %v870
    %1067 = vmatpush.msra.mxu0 %v866
    %1068 = vmatpush.msra.mxu0 %v862
    %1069 = vmatpush.msra.mxu0 %v858
    %1070 = vmatpush.msra.mxu0 %v854
    %1071 = vmatpush.msra.mxu0 %v850
    %1072 = vmatpush.msra.mxu0 %v846
    %1073 = vmatmul.f32.gmra.mxu0 %v456
    %v1074 = vpop.f32.mrf.mxu0
    %v1075 = vadd.f32 0.0, %v1074
    %1076 = vdwg.mxu0
    %1077 = vmatpush.msra.mxu0 0.0
    %1078 = vmatpush.msra.mxu0 0.0
    %1079 = vmatpush.msra.mxu0 0.0
    %1080 = vmatpush.msra.mxu0 0.0
    %1081 = vmatpush.msra.mxu0 0.0
    %1082 = vmatpush.msra.mxu0 0.0
    %1083 = vmatpush.msra.mxu0 0.0
    %1084 = vmatpush.msra.mxu0 0.0
    %1085 = vmatpush.msra.mxu0 %v875
    %1086 = vmatpush.msra.mxu0 %v871
    %1087 = vmatpush.msra.mxu0 %v867
    %1088 = vmatpush.msra.mxu0 %v863
    %1089 = vmatpush.msra.mxu0 %v859
    %1090 = vmatpush.msra.mxu0 %v855
    %1091 = vmatpush.msra.mxu0 %v851
    %1092 = vmatpush.msra.mxu0 %v847
    %1093 = vmatmul.f32.gmra.mxu0 %v456
    %v1094 = vpop.f32.mrf.mxu0
    %v1095 = vadd.f32 0.0, %v1094
    %1096 = vdwg.mxu0
    %1097 = vmatpush.msra.mxu0 0.0
    %1098 = vmatpush.msra.mxu0 0.0
    %1099 = vmatpush.msra.mxu0 0.0
    %1100 = vmatpush.msra.mxu0 0.0
    %1101 = vmatpush.msra.mxu0 0.0
    %1102 = vmatpush.msra.mxu0 0.0
    %1103 = vmatpush.msra.mxu0 0.0
    %1104 = vmatpush.msra.mxu0 0.0
    %1105 = vmatpush.msra.mxu0 %v876
    %1106 = vmatpush.msra.mxu0 %v872
    %1107 = vmatpush.msra.mxu0 %v868
    %1108 = vmatpush.msra.mxu0 %v864
    %1109 = vmatpush.msra.mxu0 %v860
    %1110 = vmatpush.msra.mxu0 %v856
    %1111 = vmatpush.msra.mxu0 %v852
    %1112 = vmatpush.msra.mxu0 %v848
    %1113 = vmatmul.f32.gmra.mxu0 %v456
    %v1114 = vpop.f32.mrf.mxu0
    %v1115 = vadd.f32 0.0, %v1114
    %1116 = vdwg.mxu0
    %1117 = vmatpush.msra.mxu0 0.0
    %1118 = vmatpush.msra.mxu0 0.0
    %1119 = vmatpush.msra.mxu0 0.0
    %1120 = vmatpush.msra.mxu0 0.0
    %1121 = vmatpush.msra.mxu0 0.0
    %1122 = vmatpush.msra.mxu0 0.0
    %1123 = vmatpush.msra.mxu0 0.0
    %1124 = vmatpush.msra.mxu0 0.0
    %1125 = vmatpush.msra.mxu0 %v873
    %1126 = vmatpush.msra.mxu0 %v869
    %1127 = vmatpush.msra.mxu0 %v865
    %1128 = vmatpush.msra.mxu0 %v861
    %1129 = vmatpush.msra.mxu0 %v857
    %1130 = vmatpush.msra.mxu0 %v853
    %1131 = vmatpush.msra.mxu0 %v849
    %1132 = vmatpush.msra.mxu0 %v845
    %1133 = vmatmul.f32.gmra.mxu0 %v539
    %v1134 = vpop.f32.mrf.mxu0
    %v1135 = vadd.f32 0.0, %v1134
    %1136 = vdwg.mxu0
    %1137 = vmatpush.msra.mxu0 0.0
    %1138 = vmatpush.msra.mxu0 0.0
    %1139 = vmatpush.msra.mxu0 0.0
    %1140 = vmatpush.msra.mxu0 0.0
    %1141 = vmatpush.msra.mxu0 0.0
    %1142 = vmatpush.msra.mxu0 0.0
    %1143 = vmatpush.msra.mxu0 0.0
    %1144 = vmatpush.msra.mxu0 0.0
    %1145 = vmatpush.msra.mxu0 %v874
    %1146 = vmatpush.msra.mxu0 %v870
    %1147 = vmatpush.msra.mxu0 %v866
    %1148 = vmatpush.msra.mxu0 %v862
    %1149 = vmatpush.msra.mxu0 %v858
    %1150 = vmatpush.msra.mxu0 %v854
    %1151 = vmatpush.msra.mxu0 %v850
    %1152 = vmatpush.msra.mxu0 %v846
    %1153 = vmatmul.f32.gmra.mxu0 %v539
    %v1154 = vpop.f32.mrf.mxu0
    %v1155 = vadd.f32 0.0, %v1154
    %1156 = vdwg.mxu0
    %1157 = vmatpush.msra.mxu0 0.0
    %1158 = vmatpush.msra.mxu0 0.0
    %1159 = vmatpush.msra.mxu0 0.0
    %1160 = vmatpush.msra.mxu0 0.0
    %1161 = vmatpush.msra.mxu0 0.0
    %1162 = vmatpush.msra.mxu0 0.0
    %1163 = vmatpush.msra.mxu0 0.0
    %1164 = vmatpush.msra.mxu0 0.0
    %1165 = vmatpush.msra.mxu0 %v875
    %1166 = vmatpush.msra.mxu0 %v871
    %1167 = vmatpush.msra.mxu0 %v867
    %1168 = vmatpush.msra.mxu0 %v863
    %1169 = vmatpush.msra.mxu0 %v859
    %1170 = vmatpush.msra.mxu0 %v855
    %1171 = vmatpush.msra.mxu0 %v851
    %1172 = vmatpush.msra.mxu0 %v847
    %1173 = vmatmul.f32.gmra.mxu0 %v539
    %v1174 = vpop.f32.mrf.mxu0
    %v1175 = vadd.f32 0.0, %v1174
    %1176 = vdwg.mxu0
    %1177 = vmatpush.msra.mxu0 0.0
    %1178 = vmatpush.msra.mxu0 0.0
    %1179 = vmatpush.msra.mxu0 0.0
    %1180 = vmatpush.msra.mxu0 0.0
    %1181 = vmatpush.msra.mxu0 0.0
    %1182 = vmatpush.msra.mxu0 0.0
    %1183 = vmatpush.msra.mxu0 0.0
    %1184 = vmatpush.msra.mxu0 0.0
    %1185 = vmatpush.msra.mxu0 %v876
    %1186 = vmatpush.msra.mxu0 %v872
    %1187 = vmatpush.msra.mxu0 %v868
    %1188 = vmatpush.msra.mxu0 %v864
    %1189 = vmatpush.msra.mxu0 %v860
    %1190 = vmatpush.msra.mxu0 %v856
    %1191 = vmatpush.msra.mxu0 %v852
    %1192 = vmatpush.msra.mxu0 %v848
    %1193 = vmatmul.f32.gmra.mxu0 %v539
    %v1194 = vpop.f32.mrf.mxu0
    %v1195 = vadd.f32 0.0, %v1194
    %1196 = vdwg.mxu0
    %v1197 = vmul.f32 %v895, %v1055
    %v1198 = vmul.f32 %v915, %v1075
    %v1199 = vmul.f32 %v935, %v1095
    %v1200 = vmul.f32 %v955, %v1115
    %v1201 = vmul.f32 %v975, %v1135
    %v1202 = vmul.f32 %v995, %v1155
    %v1203 = vmul.f32 %v1015, %v1175
    %v1204 = vmul.f32 %v1035, %v1195
    %v1205 = vsub.f32 %v1197, %v1201
    %v1206 = vsub.f32 %v1198, %v1202
    %v1207 = vsub.f32 %v1199, %v1203
    %v1208 = vsub.f32 %v1200, %v1204
    %1209 = vst [vmem:[#allocation7 + $0x20] sm:$0xff] %v1205
    %1210 = vst [vmem:[#allocation7 + $0x28] sm:$0xff] %v1206
    %1211 = vst [vmem:[#allocation7 + $0x30] sm:$0xff] %v1207
    %1212 = vst [vmem:[#allocation7 + $0x38] sm:$0xff] %v1208
    %v1213 = vmul.f32 %v975, %v1055
    %v1214 = vmul.f32 %v995, %v1075
    %v1215 = vmul.f32 %v1015, %v1095
    %v1216 = vmul.f32 %v1035, %v1115
    %v1217 = vmul.f32 %v895, %v1135
    %v1218 = vmul.f32 %v915, %v1155
    %v1219 = vmul.f32 %v935, %v1175
    %v1220 = vmul.f32 %v955, %v1195
    %v1221 = vadd.f32 %v1213, %v1217
    %v1222 = vadd.f32 %v1214, %v1218
    %v1223 = vadd.f32 %v1215, %v1219
    %v1224 = vadd.f32 %v1216, %v1220
    %1225 = vst [vmem:[#allocation7 + $0x60] sm:$0xff] %v1221
    %1226 = vst [vmem:[#allocation7 + $0x68] sm:$0xff] %v1222
    %1227 = vst [vmem:[#allocation7 + $0x70] sm:$0xff] %v1223
    %1228 = vst [vmem:[#allocation7 + $0x78] sm:$0xff] %v1224
    // Predicated region
    $region26: #{tpu_custom_call.1} parent=1 // pred_check
      _
    $region27: #{tpu_custom_call.1} parent=1 // pred_check_branch
      %1230 = sbr.rel (0) target = $region29
    $region28: #{tpu_custom_call.1} parent=1 // pred_region
      %1232 = vsyncadd [#allocation4], 0
      %s1234 = sshll.u32 [#allocation7], 4
      %s1235 = int_to_ptr.vmem [resolvable:$true] %s1234
      %s1236 = sshll.u32 %s4, 4
      %s1237 = int_to_ptr.hbm [resolvable:$true] %s1236
      %1239 = dma.vmem_to_hbm [thread:$0]  %s1235, 2048, %s1237, [#allocation4]
    $region29: #{tpu_custom_call.1} parent=1 // pred_fallthru
      _
    // Predicated region
    $region30: #{tpu_custom_call.1} parent=1 // pred_check
      _
    $region31: #{tpu_custom_call.1} parent=1 // pred_check_branch
      %1241 = sbr.rel (0) target = $region33
    $region32: #{tpu_custom_call.1} parent=1 // pred_region
      %1243 = dma.done [#allocation4], 2048
    $region33: #{tpu_custom_call.1} parent=1 // pred_fallthru
      _
    %1244 = vsyncpa [#allocation3], 1
    %1245 = vsyncpa [#allocation6], 1
    %1246 = vsyncpa [#allocation4], 1

</llo_original>
